<compile_context>
chip_gen: v6e
topology: v6e:2x2x1
jax: 0.10.0
libtpu: 0.0.40
codegen_flags: <defaults>
</compile_context>

<pallas_src>
import jax
import jax.numpy as jnp
from jax.experimental import pallas as pl
from jax.experimental.pallas import tpu as pltpu


def _round_up(n, m):
    return ((n + m - 1) // m) * m


def _mlp_kernel(x_ref,
                w1_ref, b1_ref,
                w2_ref, b2_ref,
                w3_ref, b3_ref,
                w4_ref, b4_ref,
                o_ref):
    # x tile: (TB, D) f32 -> bf16 operand for the MXU; accumulate in f32.
    x = x_ref[...].astype(jnp.bfloat16)

    h = jnp.dot(x, w1_ref[...], preferred_element_type=jnp.float32) + b1_ref[...]
    h = jnp.maximum(h, 0.0)

    h = jnp.dot(h.astype(jnp.bfloat16), w2_ref[...],
                preferred_element_type=jnp.float32) + b2_ref[...]
    h = jnp.maximum(h, 0.0)

    h = jnp.dot(h.astype(jnp.bfloat16), w3_ref[...],
                preferred_element_type=jnp.float32) + b3_ref[...]
    h = jnp.maximum(h, 0.0)

    out = jnp.dot(h.astype(jnp.bfloat16), w4_ref[...],
                  preferred_element_type=jnp.float32) + b4_ref[...]
    o_ref[...] = out.astype(o_ref.dtype)


def prepare_params(params):
    """One-time parameter prep (hoisted out of the per-call path).

    Transposes each PyTorch-layout (out, in) weight to (in, out), zero-pads the
    output width (and matching next-layer input rows) up to a multiple of 128,
    and casts weights to bf16.  Biases stay f32, padded with zeros.
    """
    w1, w2, w3, w4 = params["w1"], params["w2"], params["w3"], params["w4"]
    dim = w1.shape[1]
    h1, h2, h3, nl = w1.shape[0], w2.shape[0], w3.shape[0], w4.shape[0]
    h1p, h2p, h3p, nlp = (_round_up(d, 128) for d in (h1, h2, h3, nl))

    def prep_w(w, in_p, out_p):
        wt = w.T  # (in, out)
        wt = jnp.pad(wt, ((0, in_p - wt.shape[0]), (0, out_p - wt.shape[1])))
        return wt.astype(jnp.bfloat16)

    def prep_b(b, out_p):
        return jnp.pad(b, (0, out_p - b.shape[0])).reshape(1, out_p).astype(jnp.float32)

    prepped = {
        "w1": prep_w(w1, dim, h1p), "b1": prep_b(params["b1"], h1p),
        "w2": prep_w(w2, h1p, h2p), "b2": prep_b(params["b2"], h2p),
        "w3": prep_w(w3, h2p, h3p), "b3": prep_b(params["b3"], h3p),
        "w4": prep_w(w4, h3p, nlp), "b4": prep_b(params["b4"], nlp),
    }
    return prepped, nl


def adv_linear_classifier(x, prepped, num_labels):
    """x: (B, C, H, W) or (B, D).  prepped: output of prepare_params."""
    B = x.shape[0]
    x2d = x.reshape(B, -1).astype(jnp.float32)   # x.view(x.size(0), -1)
    D = x2d.shape[1]

    # Batch tiling: TB rows per grid step (multiple of 8 sublanes), pad B up.
    TB = min(128, _round_up(B, 8))
    Bp = _round_up(B, TB)
    if Bp != B:
        x2d = jnp.pad(x2d, ((0, Bp - B), (0, 0)))

    w1, b1 = prepped["w1"], prepped["b1"]
    w2, b2 = prepped["w2"], prepped["b2"]
    w3, b3 = prepped["w3"], prepped["b3"]
    w4, b4 = prepped["w4"], prepped["b4"]
    nlp = w4.shape[1]

    # Weights/biases: constant block index -> VMEM-resident across grid steps.
    # NOTE: for very large weights on v7x (64 MiB VMEM), single-buffer them via
    # pipeline_mode=pl.Buffered(1) or K-tile W1; unnecessary at these sizes.
    resident = lambda a: pl.BlockSpec(a.shape, lambda i, _nd=a.ndim: (0,) * _nd)

    flops = 2 * Bp * (w1.shape[0] * w1.shape[1] + w2.shape[0] * w2.shape[1]
                      + w3.shape[0] * w3.shape[1] + w4.shape[0] * w4.shape[1])
    bytes_accessed = (int(x2d.size) * 4
                      + sum(int(prepped[k].size) * prepped[k].dtype.itemsize
                            for k in prepped)
                      + Bp * nlp * 4)

    out = pl.pallas_call(
        _mlp_kernel,
        out_shape=jax.ShapeDtypeStruct((Bp, nlp), jnp.float32),
        grid=(Bp // TB,),
        in_specs=[pl.BlockSpec((TB, D), lambda i: (i, 0)),
                  resident(w1), resident(b1),
                  resident(w2), resident(b2),
                  resident(w3), resident(b3),
                  resident(w4), resident(b4)],
        out_specs=pl.BlockSpec((TB, nlp), lambda i: (i, 0)),
        compiler_params=pltpu.CompilerParams(
            dimension_semantics=("parallel",),        # shard over v7x's 2 TCs
            vmem_limit_bytes=48 * 1024 * 1024),       # under v7x 64 MiB physical
        cost_estimate=pl.CostEstimate(
            flops=int(flops), transcendentals=0,
            bytes_accessed=int(bytes_accessed)),
    )(x2d, w1, b1, w2, b2, w3, b3, w4, b4)

    # Strip batch padding and the lane-padding on the label axis.
    return out[:B, :num_labels]


def init_params(key, dim, num_labels, hidden_size):
    """Deterministic N(0,1) init, matching AdvLinearClassifier.initialize()."""
    h = hidden_size
    sizes = [(h, dim), (h // 2, h), (h // 4, h // 2), (num_labels, h // 4)]
    params = {}
    keys = jax.random.split(key, 8)
    for i, (out_f, in_f) in enumerate(sizes):
        params[f"w{i+1}"] = jax.random.normal(keys[2 * i], (out_f, in_f), jnp.float32)
        params[f"b{i+1}"] = jax.random.normal(keys[2 * i + 1], (out_f,), jnp.float32)
    return params


def reference_forward_f32(x, params):
    """Pure-JAX f32 reference (original PyTorch semantics)."""
    y = x.reshape(x.shape[0], -1)
    y = jnp.maximum(y @ params["w1"].T + params["b1"], 0.0)
    y = jnp.maximum(y @ params["w2"].T + params["b2"], 0.0)
    y = jnp.maximum(y @ params["w3"].T + params["b3"], 0.0)
    return y @ params["w4"].T + params["b4"]


def reference_forward_bf16(x, params):
    """Pure-JAX reference emulating the kernel's bf16-in / f32-accumulate math."""
    def lin(h, w, b):
        return jnp.dot(h.astype(jnp.bfloat16), w.T.astype(jnp.bfloat16),
                       preferred_element_type=jnp.float32) + b
    y = x.reshape(x.shape[0], -1).astype(jnp.float32)
    y = jnp.maximum(lin(y, params["w1"], params["b1"]), 0.0)
    y = jnp.maximum(lin(y, params["w2"], params["b2"]), 0.0)
    y = jnp.maximum(lin(y, params["w3"], params["b3"]), 0.0)
    return lin(y, params["w4"], params["b4"])


if __name__ == "__main__":
    # Small shapes: batch=8, input NCHW (8, 4, 4, 4) -> dim=64,
    # hidden_size=32 (layers 64->32->16->8->16), num_labels=16.
    key = jax.random.PRNGKey(0)
    kx, kp = jax.random.split(key)

    B, C, H, W = 8, 4, 4, 4
    dim = C * H * W
    hidden_size = 32
    num_labels = 16

    x = jax.random.normal(kx, (B, C, H, W), jnp.float32)
    params = init_params(kp, dim, num_labels, hidden_size)

    # One-time parameter preparation (transpose + pad + bf16 cast), hoisted
    # out of the per-call path.
    prepped, nl = prepare_params(params)

    out = adv_linear_classifier(x, prepped, nl)
    out = jax.block_until_ready(out)
    assert out.shape == (B, num_labels)

    # Exact-math check against a reference using the same bf16/f32 recipe.
    ref_bf16 = reference_forward_bf16(x, params)
    assert jnp.allclose(out, ref_bf16, atol=1e-1, rtol=1e-2), "mismatch vs bf16 reference"

    # Loose check against the full-f32 PyTorch-semantics reference.
    ref_f32 = reference_forward_f32(x, params)
    scale = float(jnp.max(jnp.abs(ref_f32)))
    assert float(jnp.max(jnp.abs(out - ref_f32))) <= 0.05 * scale, "mismatch vs f32 reference"

    print("KERNEL_OK")
</pallas_src>

<mosaic_0001>
module attributes {stable_mosaic.version = 11 : i64} {
  func.func @_mlp_kernel(%arg0: i32, %arg1: memref<8x64xf32, #tpu.memory_space<vmem>>, %arg2: memref<64x128xbf16, #tpu.memory_space<vmem>>, %arg3: memref<1x128xf32, #tpu.memory_space<vmem>>, %arg4: memref<128x128xbf16, #tpu.memory_space<vmem>>, %arg5: memref<1x128xf32, #tpu.memory_space<vmem>>, %arg6: memref<128x128xbf16, #tpu.memory_space<vmem>>, %arg7: memref<1x128xf32, #tpu.memory_space<vmem>>, %arg8: memref<128x128xbf16, #tpu.memory_space<vmem>>, %arg9: memref<1x128xf32, #tpu.memory_space<vmem>>, %arg10: memref<8x128xf32, #tpu.memory_space<vmem>>) attributes {dimension_semantics = [#tpu.dimension_semantics<parallel>], iteration_bounds = array<i64: 1>, scalar_prefetch = 0 : i64, scratch_operands = 0 : i64, tpu.core_type = #tpu.core_type<tc>, window_params = [{transform_indices = @transform_0, window_bounds = array<i64: 8, 64>}, {pipeline_mode = #tpu.pipeline_mode<synchronous>, transform_indices = @transform_1, window_bounds = array<i64: 64, 128>}, {pipeline_mode = #tpu.pipeline_mode<synchronous>, transform_indices = @transform_2, window_bounds = array<i64: 1, 128>}, {pipeline_mode = #tpu.pipeline_mode<synchronous>, transform_indices = @transform_3, window_bounds = array<i64: 128, 128>}, {pipeline_mode = #tpu.pipeline_mode<synchronous>, transform_indices = @transform_4, window_bounds = array<i64: 1, 128>}, {pipeline_mode = #tpu.pipeline_mode<synchronous>, transform_indices = @transform_5, window_bounds = array<i64: 128, 128>}, {pipeline_mode = #tpu.pipeline_mode<synchronous>, transform_indices = @transform_6, window_bounds = array<i64: 1, 128>}, {pipeline_mode = #tpu.pipeline_mode<synchronous>, transform_indices = @transform_7, window_bounds = array<i64: 128, 128>}, {pipeline_mode = #tpu.pipeline_mode<synchronous>, transform_indices = @transform_8, window_bounds = array<i64: 1, 128>}, {transform_indices = @transform_9, window_bounds = array<i64: 8, 128>}]} {
    %c0 = arith.constant 0 : index
    %c0_0 = arith.constant 0 : index
    %0 = vector.load %arg1[%c0, %c0_0] : memref<8x64xf32, #tpu.memory_space<vmem>>, vector<8x64xf32>
    %1 = arith.truncf %0 : vector<8x64xf32> to vector<8x64xbf16>
    %c0_1 = arith.constant 0 : index
    %c0_2 = arith.constant 0 : index
    %2 = vector.load %arg2[%c0_1, %c0_2] : memref<64x128xbf16, #tpu.memory_space<vmem>>, vector<64x128xbf16>
    %cst = arith.constant dense<0.000000e+00> : vector<8x128xf32>
    %3 = tpu.matmul %1, %2, %cst {dimension_numbers = #tpu.dot_dimension_numbers<[1], [0], [0], [1], [0, 0, 1, 1], [], []>} : vector<8x64xbf16>, vector<64x128xbf16>, vector<8x128xf32> -> vector<8x128xf32>
    %c0_3 = arith.constant 0 : index
    %c0_4 = arith.constant 0 : index
    %4 = vector.load %arg3[%c0_3, %c0_4] : memref<1x128xf32, #tpu.memory_space<vmem>>, vector<1x128xf32>
    %5 = vector.broadcast %4 : vector<1x128xf32> to vector<8x128xf32>
    %6 = arith.addf %3, %5 : vector<8x128xf32>
    %cst_5 = arith.constant 0.000000e+00 : f32
    %7 = vector.broadcast %cst_5 : f32 to vector<8x128xf32>
    %8 = arith.maximumf %6, %7 : vector<8x128xf32>
    %9 = arith.truncf %8 : vector<8x128xf32> to vector<8x128xbf16>
    %c0_6 = arith.constant 0 : index
    %c0_7 = arith.constant 0 : index
    %10 = vector.load %arg4[%c0_6, %c0_7] : memref<128x128xbf16, #tpu.memory_space<vmem>>, vector<128x128xbf16>
    %cst_8 = arith.constant dense<0.000000e+00> : vector<8x128xf32>
    %11 = tpu.matmul %9, %10, %cst_8 {dimension_numbers = #tpu.dot_dimension_numbers<[1], [0], [0], [1], [0, 0, 1, 1], [], []>} : vector<8x128xbf16>, vector<128x128xbf16>, vector<8x128xf32> -> vector<8x128xf32>
    %c0_9 = arith.constant 0 : index
    %c0_10 = arith.constant 0 : index
    %12 = vector.load %arg5[%c0_9, %c0_10] : memref<1x128xf32, #tpu.memory_space<vmem>>, vector<1x128xf32>
    %13 = vector.broadcast %12 : vector<1x128xf32> to vector<8x128xf32>
    %14 = arith.addf %11, %13 : vector<8x128xf32>
    %cst_11 = arith.constant 0.000000e+00 : f32
    %15 = vector.broadcast %cst_11 : f32 to vector<8x128xf32>
    %16 = arith.maximumf %14, %15 : vector<8x128xf32>
    %17 = arith.truncf %16 : vector<8x128xf32> to vector<8x128xbf16>
    %c0_12 = arith.constant 0 : index
    %c0_13 = arith.constant 0 : index
    %18 = vector.load %arg6[%c0_12, %c0_13] : memref<128x128xbf16, #tpu.memory_space<vmem>>, vector<128x128xbf16>
    %cst_14 = arith.constant dense<0.000000e+00> : vector<8x128xf32>
    %19 = tpu.matmul %17, %18, %cst_14 {dimension_numbers = #tpu.dot_dimension_numbers<[1], [0], [0], [1], [0, 0, 1, 1], [], []>} : vector<8x128xbf16>, vector<128x128xbf16>, vector<8x128xf32> -> vector<8x128xf32>
    %c0_15 = arith.constant 0 : index
    %c0_16 = arith.constant 0 : index
    %20 = vector.load %arg7[%c0_15, %c0_16] : memref<1x128xf32, #tpu.memory_space<vmem>>, vector<1x128xf32>
    %21 = vector.broadcast %20 : vector<1x128xf32> to vector<8x128xf32>
    %22 = arith.addf %19, %21 : vector<8x128xf32>
    %cst_17 = arith.constant 0.000000e+00 : f32
    %23 = vector.broadcast %cst_17 : f32 to vector<8x128xf32>
    %24 = arith.maximumf %22, %23 : vector<8x128xf32>
    %25 = arith.truncf %24 : vector<8x128xf32> to vector<8x128xbf16>
    %c0_18 = arith.constant 0 : index
    %c0_19 = arith.constant 0 : index
    %26 = vector.load %arg8[%c0_18, %c0_19] : memref<128x128xbf16, #tpu.memory_space<vmem>>, vector<128x128xbf16>
    %cst_20 = arith.constant dense<0.000000e+00> : vector<8x128xf32>
    %27 = tpu.matmul %25, %26, %cst_20 {dimension_numbers = #tpu.dot_dimension_numbers<[1], [0], [0], [1], [0, 0, 1, 1], [], []>} : vector<8x128xbf16>, vector<128x128xbf16>, vector<8x128xf32> -> vector<8x128xf32>
    %c0_21 = arith.constant 0 : index
    %c0_22 = arith.constant 0 : index
    %28 = vector.load %arg9[%c0_21, %c0_22] : memref<1x128xf32, #tpu.memory_space<vmem>>, vector<1x128xf32>
    %29 = vector.broadcast %28 : vector<1x128xf32> to vector<8x128xf32>
    %30 = arith.addf %27, %29 : vector<8x128xf32>
    %c0_23 = arith.constant 0 : index
    %c0_24 = arith.constant 0 : index
    %31 = vector.load %arg10[%c0_23, %c0_24] : memref<8x128xf32, #tpu.memory_space<vmem>>, vector<8x128xf32>
    tpu.vector_store %arg10[%c0_23, %c0_24], %30 {strides = array<i32>} : memref<8x128xf32, #tpu.memory_space<vmem>>, vector<8x128xf32>,
    return
  }
  func.func @transform_0(%arg0: i32) -> (i32, i32) {
    %c0_i32 = arith.constant 0 : i32
    %c0_i32_0 = arith.constant 0 : i32
    return %arg0, %c0_i32 : i32, i32
  }
  func.func @transform_1(%arg0: i32) -> (i32, i32) {
    %c0_i32 = arith.constant 0 : i32
    %c0_i32_0 = arith.constant 0 : i32
    %c0_i32_1 = arith.constant 0 : i32
    return %c0_i32, %c0_i32_0 : i32, i32
  }
  func.func @transform_2(%arg0: i32) -> (i32, i32) {
    %c0_i32 = arith.constant 0 : i32
    %c0_i32_0 = arith.constant 0 : i32
    %c0_i32_1 = arith.constant 0 : i32
    return %c0_i32, %c0_i32_0 : i32, i32
  }
  func.func @transform_3(%arg0: i32) -> (i32, i32) {
    %c0_i32 = arith.constant 0 : i32
    %c0_i32_0 = arith.constant 0 : i32
    %c0_i32_1 = arith.constant 0 : i32
    return %c0_i32, %c0_i32_0 : i32, i32
  }
  func.func @transform_4(%arg0: i32) -> (i32, i32) {
    %c0_i32 = arith.constant 0 : i32
    %c0_i32_0 = arith.constant 0 : i32
    %c0_i32_1 = arith.constant 0 : i32
    return %c0_i32, %c0_i32_0 : i32, i32
  }
  func.func @transform_5(%arg0: i32) -> (i32, i32) {
    %c0_i32 = arith.constant 0 : i32
    %c0_i32_0 = arith.constant 0 : i32
    %c0_i32_1 = arith.constant 0 : i32
    return %c0_i32, %c0_i32_0 : i32, i32
  }
  func.func @transform_6(%arg0: i32) -> (i32, i32) {
    %c0_i32 = arith.constant 0 : i32
    %c0_i32_0 = arith.constant 0 : i32
    %c0_i32_1 = arith.constant 0 : i32
    return %c0_i32, %c0_i32_0 : i32, i32
  }
  func.func @transform_7(%arg0: i32) -> (i32, i32) {
    %c0_i32 = arith.constant 0 : i32
    %c0_i32_0 = arith.constant 0 : i32
    %c0_i32_1 = arith.constant 0 : i32
    return %c0_i32, %c0_i32_0 : i32, i32
  }
  func.func @transform_8(%arg0: i32) -> (i32, i32) {
    %c0_i32 = arith.constant 0 : i32
    %c0_i32_0 = arith.constant 0 : i32
    %c0_i32_1 = arith.constant 0 : i32
    return %c0_i32, %c0_i32_0 : i32, i32
  }
  func.func @transform_9(%arg0: i32) -> (i32, i32) {
    %c0_i32 = arith.constant 0 : i32
    %c0_i32_0 = arith.constant 0 : i32
    return %arg0, %c0_i32 : i32, i32
  }
}

</mosaic_0001>

<llo_original>
// kernel: tpu_custom_call.1
$region0: #{tpu_custom_call.1}
  #allocation0 [shape = 'u32[]', space=smem, size = 0x4, offset = 0x4, fixed_abs, tag = 'smem constant byte address 0x4 - core index']
  #allocation1 [shape = 'u32[144,128]{1,0:T(1,128)}', space=vmem, size = 0x12000, scoped, tag = 'internal scratch']
  %s0 = inlined_call_operand.hbm [shape: f32[8,64], index: 0, kind: input, shape index: {}]
  %s1 = inlined_call_operand.hbm [shape: bf16[64,128], index: 1, kind: input, shape index: {}]
  %s2 = inlined_call_operand.vmem [shape: f32[1,128], index: 2, kind: input, shape index: {}]
  %s3 = inlined_call_operand.hbm [shape: bf16[128,128], index: 3, kind: input, shape index: {}]
  %s4 = inlined_call_operand.vmem [shape: f32[1,128], index: 4, kind: input, shape index: {}]
  %s5 = inlined_call_operand.hbm [shape: bf16[128,128], index: 5, kind: input, shape index: {}]
  %s6 = inlined_call_operand.vmem [shape: f32[1,128], index: 6, kind: input, shape index: {}]
  %s7 = inlined_call_operand.hbm [shape: bf16[128,128], index: 7, kind: input, shape index: {}]
  %s8 = inlined_call_operand.vmem [shape: f32[1,128], index: 8, kind: input, shape index: {}]
  %s9 = inlined_call_operand.hbm [shape: f32[8,128], index: 9, kind: output, shape index: {}]
  %s10 = sld [smem:[#allocation0]]
  $region66: #{tpu_custom_call.1} parent=0
    _
  %s12 = ssub.s32 1, %s10
  %s13 = scalar_select 0, %s12, %s10
  $region1: #{tpu_custom_call.1} parent=0
    #allocation2 [shape = 'u8[4096]{0}', space=vmem, size = 0x1000, scoped, tag = 'input window, operand 0, single buffered']
    #allocation3 [shape = 's32[1]{0}', space=sflag, size = 0x4, scoped, tag = 'scoped memory for tpu_custom_call.1']
    #allocation4 [shape = 's32[1]{0}', space=sflag, size = 0x4, scoped, tag = 'scoped memory for tpu_custom_call.1']
    #allocation5 [shape = 'u8[16384]{0}', space=vmem, size = 0x4000, scoped, tag = 'input window, operand 1, single buffered']
    #allocation6 [shape = 's32[1]{0}', space=sflag, size = 0x4, scoped, tag = 'scoped memory for tpu_custom_call.1']
    #allocation7 [shape = 'u8[32768]{0}', space=vmem, size = 0x8000, scoped, tag = 'input window, operand 3, single buffered']
    #allocation8 [shape = 'u8[32768]{0}', space=vmem, size = 0x8000, scoped, tag = 'input window, operand 5, single buffered']
    #allocation9 [shape = 's32[1]{0}', space=sflag, size = 0x4, scoped, tag = 'scoped memory for tpu_custom_call.1']
    #allocation10 [shape = 'u8[32768]{0}', space=vmem, size = 0x8000, scoped, tag = 'input window, operand 7, single buffered']
    #allocation11 [shape = 'u8[4096]{0}', space=vmem, size = 0x1000, scoped, tag = 'output window, operand 0, single buffered']
    %14 = vsyncpa [#allocation3], 0
    %15 = vsyncpa [#allocation6], 0
    %16 = vsyncpa [#allocation9], 0
    %17 = vsyncpa [#allocation4], 0
    // Predicated region
    $region2: #{tpu_custom_call.1} parent=1 // pred_check
      _
    $region3: #{tpu_custom_call.1} parent=1 // pred_check_branch
      %19 = sbr.rel (0) target = $region5
    $region4: #{tpu_custom_call.1} parent=1 // pred_region
      %s21 = ssub.s32 128, 128
      %22 = vsyncadd [#allocation3], %s21
      %s24 = sshll.u32 [#allocation2], 4
      %s25 = int_to_ptr.vmem [resolvable:$true] %s24
      %27 = dma.hbm_to_vmem [thread:$0]  %s0, 128, %s25, [#allocation3]
    $region5: #{tpu_custom_call.1} parent=1 // pred_fallthru
      _
    // Predicated region
    $region6: #{tpu_custom_call.1} parent=1 // pred_check
      _
    $region7: #{tpu_custom_call.1} parent=1 // pred_check_branch
      %29 = sbr.rel (0) target = $region9
    $region8: #{tpu_custom_call.1} parent=1 // pred_region
      %s31 = ssub.s32 512, 512
      %32 = vsyncadd [#allocation6], %s31
      %s33 = sshll.u32 [#allocation5], 4
      %s34 = int_to_ptr.vmem [resolvable:$true] %s33
      %39 = dma.hbm_to_vmem [thread:$0]  %s1, 512, %s34, [#allocation6], 64, 64, 4
    $region9: #{tpu_custom_call.1} parent=1 // pred_fallthru
      _
    // Predicated region
    $region10: #{tpu_custom_call.1} parent=1 // pred_check
      _
    $region11: #{tpu_custom_call.1} parent=1 // pred_check_branch
      %41 = sbr.rel (0) target = $region13
    $region12: #{tpu_custom_call.1} parent=1 // pred_region
      _
    $region13: #{tpu_custom_call.1} parent=1 // pred_fallthru
      _
    // Predicated region
    $region14: #{tpu_custom_call.1} parent=1 // pred_check
      _
    $region15: #{tpu_custom_call.1} parent=1 // pred_check_branch
      %43 = sbr.rel (0) target = $region17
    $region16: #{tpu_custom_call.1} parent=1 // pred_region
      %s45 = ssub.s32 1024, 1024
      %46 = vsyncadd [#allocation6], %s45
      %s47 = sshll.u32 [#allocation7], 4
      %s48 = int_to_ptr.vmem [resolvable:$true] %s47
      %53 = dma.hbm_to_vmem [thread:$0]  %s3, 1024, %s48, [#allocation6], 64, 64, 4
    $region17: #{tpu_custom_call.1} parent=1 // pred_fallthru
      _
    // Predicated region
    $region18: #{tpu_custom_call.1} parent=1 // pred_check
      _
    $region19: #{tpu_custom_call.1} parent=1 // pred_check_branch
      %55 = sbr.rel (0) target = $region21
    $region20: #{tpu_custom_call.1} parent=1 // pred_region
      _
    $region21: #{tpu_custom_call.1} parent=1 // pred_fallthru
      _
    // Predicated region
    $region22: #{tpu_custom_call.1} parent=1 // pred_check
      _
    $region23: #{tpu_custom_call.1} parent=1 // pred_check_branch
      %57 = sbr.rel (0) target = $region25
    $region24: #{tpu_custom_call.1} parent=1 // pred_region
      %s59 = ssub.s32 1024, 1024
      %60 = vsyncadd [#allocation9], %s59
      %s61 = sshll.u32 [#allocation8], 4
      %s62 = int_to_ptr.vmem [resolvable:$true] %s61
      %67 = dma.hbm_to_vmem [thread:$0]  %s5, 1024, %s62, [#allocation9], 64, 64, 4
    $region25: #{tpu_custom_call.1} parent=1 // pred_fallthru
      _
    // Predicated region
    $region26: #{tpu_custom_call.1} parent=1 // pred_check
      _
    $region27: #{tpu_custom_call.1} parent=1 // pred_check_branch
      %69 = sbr.rel (0) target = $region29
    $region28: #{tpu_custom_call.1} parent=1 // pred_region
      _
    $region29: #{tpu_custom_call.1} parent=1 // pred_fallthru
      _
    // Predicated region
    $region30: #{tpu_custom_call.1} parent=1 // pred_check
      _
    $region31: #{tpu_custom_call.1} parent=1 // pred_check_branch
      %71 = sbr.rel (0) target = $region33
    $region32: #{tpu_custom_call.1} parent=1 // pred_region
      %s73 = ssub.s32 1024, 1024
      %74 = vsyncadd [#allocation9], %s73
      %s75 = sshll.u32 [#allocation10], 4
      %s76 = int_to_ptr.vmem [resolvable:$true] %s75
      %81 = dma.hbm_to_vmem [thread:$0]  %s7, 1024, %s76, [#allocation9], 64, 64, 4
    $region33: #{tpu_custom_call.1} parent=1 // pred_fallthru
      _
    // Predicated region
    $region34: #{tpu_custom_call.1} parent=1 // pred_check
      _
    $region35: #{tpu_custom_call.1} parent=1 // pred_check_branch
      %83 = sbr.rel (0) target = $region37
    $region36: #{tpu_custom_call.1} parent=1 // pred_region
      _
    $region37: #{tpu_custom_call.1} parent=1 // pred_fallthru
      _
    // Predicated region
    $region38: #{tpu_custom_call.1} parent=1 // pred_check
      _
    $region39: #{tpu_custom_call.1} parent=1 // pred_check_branch
      %85 = sbr.rel (0) target = $region41
    $region40: #{tpu_custom_call.1} parent=1 // pred_region
      %86 = dma.done [#allocation3], 128
    $region41: #{tpu_custom_call.1} parent=1 // pred_fallthru
      _
    // Predicated region
    $region42: #{tpu_custom_call.1} parent=1 // pred_check
      _
    $region43: #{tpu_custom_call.1} parent=1 // pred_check_branch
      %88 = sbr.rel (0) target = $region45
    $region44: #{tpu_custom_call.1} parent=1 // pred_region
      %89 = dma.done [#allocation6], 512
    $region45: #{tpu_custom_call.1} parent=1 // pred_fallthru
      _
    // Predicated region
    $region46: #{tpu_custom_call.1} parent=1 // pred_check
      _
    $region47: #{tpu_custom_call.1} parent=1 // pred_check_branch
      %91 = sbr.rel (0) target = $region49
    $region48: #{tpu_custom_call.1} parent=1 // pred_region
      %92 = dma.done [#allocation6], 1024
    $region49: #{tpu_custom_call.1} parent=1 // pred_fallthru
      _
    // Predicated region
    $region50: #{tpu_custom_call.1} parent=1 // pred_check
      _
    $region51: #{tpu_custom_call.1} parent=1 // pred_check_branch
      %94 = sbr.rel (0) target = $region53
    $region52: #{tpu_custom_call.1} parent=1 // pred_region
      %95 = dma.done [#allocation9], 1024
    $region53: #{tpu_custom_call.1} parent=1 // pred_fallthru
      _
    // Predicated region
    $region54: #{tpu_custom_call.1} parent=1 // pred_check
      _
    $region55: #{tpu_custom_call.1} parent=1 // pred_check_branch
      %97 = sbr.rel (0) target = $region57
    $region56: #{tpu_custom_call.1} parent=1 // pred_region
      %98 = dma.done [#allocation9], 1024
    $region57: #{tpu_custom_call.1} parent=1 // pred_fallthru
      _
    %v100 = vld [vmem:[#allocation2] sm:$0xff]
    %v101 = vpack.c.bf16 %v100, %v100
    %v102 = vld [vmem:[#allocation5] sm:$0xf]
    %v103 = vld [vmem:[#allocation5 + $0x4] sm:$0xf]
    %v104 = vld [vmem:[#allocation5 + $0x8] sm:$0xf]
    %v105 = vld [vmem:[#allocation5 + $0xc] sm:$0xf]
    %v106 = vld [vmem:[#allocation5 + $0x10] sm:$0xf]
    %v107 = vld [vmem:[#allocation5 + $0x14] sm:$0xf]
    %v108 = vld [vmem:[#allocation5 + $0x18] sm:$0xf]
    %v109 = vld [vmem:[#allocation5 + $0x1c] sm:$0xf]
    %v110 = vld [vmem:[%s2] sm:$0x1]
    %v112 = vlaneseq
    %v113 = vshrl.u32 %v112, 7
    %v114 = vsub.s32 0, %v113
    %v115 = vrot.slane %v110, %v114
    %v125 = vunpack.c.l.b16 %v102
    %v126 = vunpack.c.l.b16 %v103
    %v127 = vunpack.c.l.b16 %v104
    %v128 = vunpack.c.l.b16 %v105
    %v129 = vunpack.c.l.b16 %v106
    %v130 = vunpack.c.l.b16 %v107
    %v131 = vunpack.c.l.b16 %v108
    %v132 = vunpack.c.l.b16 %v109
    %v133 = vpack.c.b16 %v126, %v125
    %v134 = vpack.c.b16 %v128, %v127
    %v135 = vpack.c.b16 %v130, %v129
    %v136 = vpack.c.b16 %v132, %v131
    %vm141 = vcmask 523264
    %v143 = vsel %vm141, %v101, 0
    %145 = vmatprep.subr.bf16.mxu0 0
    %146 = vmatpush1.bf16.msra.mxu0 0
    %147 = vmatprep.subr.bf16.mxu0 0
    %148 = vmatpush1.bf16.msra.mxu0 0
    %149 = vmatprep.subr.bf16.mxu0 0
    %150 = vmatpush1.bf16.msra.mxu0 0
    %151 = vmatprep.subr.bf16.mxu0 0
    %152 = vmatpush1.bf16.msra.mxu0 0
    %153 = vmatprep.subr.bf16.mxu0 0
    %154 = vmatpush1.bf16.msra.mxu0 %v136
    %155 = vmatprep.subr.bf16.mxu0 0
    %156 = vmatpush1.bf16.msra.mxu0 %v135
    %157 = vmatprep.subr.bf16.mxu0 0
    %158 = vmatpush1.bf16.msra.mxu0 %v134
    %159 = vmatprep.subr.bf16.mxu0 0
    %160 = vmatpush1.bf16.msra.mxu0 %v133
    %161 = vmatprep.subr.bf16.mxu0 0
    %162 = vmatpush2.bf16.msra.mxu0 0
    %163 = vmatprep.subr.bf16.mxu0 0
    %164 = vmatpush2.bf16.msra.mxu0 0
    %165 = vmatprep.subr.bf16.mxu0 0
    %166 = vmatpush2.bf16.msra.mxu0 0
    %167 = vmatprep.subr.bf16.mxu0 0
    %168 = vmatpush2.bf16.msra.mxu0 0
    %169 = vmatprep.subr.bf16.mxu0 0
    %170 = vmatpush2.bf16.msra.mxu0 0
    %171 = vmatprep.subr.bf16.mxu0 0
    %172 = vmatpush2.bf16.msra.mxu0 0
    %173 = vmatprep.subr.bf16.mxu0 0
    %174 = vmatpush2.bf16.msra.mxu0 0
    %175 = vmatprep.subr.bf16.mxu0 0
    %176 = vmatpush2.bf16.msra.mxu0 0
    %177 = vmatprep.mubr.bf16.mxu0 0
    %178 = vmatmul.mubr.bf16.gmra.mxu0 %v143
    %v179 = vpop.f32.mrf.mxu0
    %v180 = vadd.f32 %v115, %v179
    %v181 = vpop.f32.mrf.mxu0
    %v182 = vpop.f32.mrf.mxu0
    %v183 = vpop.f32.mrf.mxu0
    %184 = vdwg.mxu0
    %v185 = vmax.f32 %v180, 0.0
    %v186 = vpack.c.bf16 %v185, %v185
    %v187 = vld [vmem:[#allocation7] sm:$0xf]
    %v188 = vld [vmem:[#allocation7 + $0x4] sm:$0xf]
    %v189 = vld [vmem:[#allocation7 + $0x8] sm:$0xf]
    %v190 = vld [vmem:[#allocation7 + $0xc] sm:$0xf]
    %v191 = vld [vmem:[#allocation7 + $0x10] sm:$0xf]
    %v192 = vld [vmem:[#allocation7 + $0x14] sm:$0xf]
    %v193 = vld [vmem:[#allocation7 + $0x18] sm:$0xf]
    %v194 = vld [vmem:[#allocation7 + $0x1c] sm:$0xf]
    %v195 = vld [vmem:[#allocation7 + $0x20] sm:$0xf]
    %v196 = vld [vmem:[#allocation7 + $0x24] sm:$0xf]
    %v197 = vld [vmem:[#allocation7 + $0x28] sm:$0xf]
    %v198 = vld [vmem:[#allocation7 + $0x2c] sm:$0xf]
    %v199 = vld [vmem:[#allocation7 + $0x30] sm:$0xf]
    %v200 = vld [vmem:[#allocation7 + $0x34] sm:$0xf]
    %v201 = vld [vmem:[#allocation7 + $0x38] sm:$0xf]
    %v202 = vld [vmem:[#allocation7 + $0x3c] sm:$0xf]
    %v203 = vld [vmem:[%s4] sm:$0x1]
    %v205 = vlaneseq
    %v206 = vshrl.u32 %v205, 7
    %v207 = vsub.s32 0, %v206
    %v208 = vrot.slane %v203, %v207
    %v226 = vunpack.c.l.b16 %v187
    %v227 = vunpack.c.l.b16 %v188
    %v228 = vunpack.c.l.b16 %v189
    %v229 = vunpack.c.l.b16 %v190
    %v230 = vunpack.c.l.b16 %v191
    %v231 = vunpack.c.l.b16 %v192
    %v232 = vunpack.c.l.b16 %v193
    %v233 = vunpack.c.l.b16 %v194
    %v234 = vunpack.c.l.b16 %v195
    %v235 = vunpack.c.l.b16 %v196
    %v236 = vunpack.c.l.b16 %v197
    %v237 = vunpack.c.l.b16 %v198
    %v238 = vunpack.c.l.b16 %v199
    %v239 = vunpack.c.l.b16 %v200
    %v240 = vunpack.c.l.b16 %v201
    %v241 = vunpack.c.l.b16 %v202
    %v242 = vpack.c.b16 %v227, %v226
    %v243 = vpack.c.b16 %v229, %v228
    %v244 = vpack.c.b16 %v231, %v230
    %v245 = vpack.c.b16 %v233, %v232
    %v246 = vpack.c.b16 %v235, %v234
    %v247 = vpack.c.b16 %v237, %v236
    %v248 = vpack.c.b16 %v239, %v238
    %v249 = vpack.c.b16 %v241, %v240
    %258 = vmatprep.subr.bf16.mxu0 0
    %259 = vmatpush1.bf16.msra.mxu0 %v249
    %260 = vmatprep.subr.bf16.mxu0 0
    %261 = vmatpush1.bf16.msra.mxu0 %v248
    %262 = vmatprep.subr.bf16.mxu0 0
    %263 = vmatpush1.bf16.msra.mxu0 %v247
    %264 = vmatprep.subr.bf16.mxu0 0
    %265 = vmatpush1.bf16.msra.mxu0 %v246
    %266 = vmatprep.subr.bf16.mxu0 0
    %267 = vmatpush1.bf16.msra.mxu0 %v245
    %268 = vmatprep.subr.bf16.mxu0 0
    %269 = vmatpush1.bf16.msra.mxu0 %v244
    %270 = vmatprep.subr.bf16.mxu0 0
    %271 = vmatpush1.bf16.msra.mxu0 %v243
    %272 = vmatprep.subr.bf16.mxu0 0
    %273 = vmatpush1.bf16.msra.mxu0 %v242
    %274 = vmatprep.subr.bf16.mxu0 0
    %275 = vmatpush2.bf16.msra.mxu0 0
    %276 = vmatprep.subr.bf16.mxu0 0
    %277 = vmatpush2.bf16.msra.mxu0 0
    %278 = vmatprep.subr.bf16.mxu0 0
    %279 = vmatpush2.bf16.msra.mxu0 0
    %280 = vmatprep.subr.bf16.mxu0 0
    %281 = vmatpush2.bf16.msra.mxu0 0
    %282 = vmatprep.subr.bf16.mxu0 0
    %283 = vmatpush2.bf16.msra.mxu0 0
    %284 = vmatprep.subr.bf16.mxu0 0
    %285 = vmatpush2.bf16.msra.mxu0 0
    %286 = vmatprep.subr.bf16.mxu0 0
    %287 = vmatpush2.bf16.msra.mxu0 0
    %288 = vmatprep.subr.bf16.mxu0 0
    %289 = vmatpush2.bf16.msra.mxu0 0
    %290 = vmatprep.mubr.bf16.mxu0 0
    %291 = vmatmul.mubr.bf16.gmra.mxu0 %v186
    %v292 = vpop.f32.mrf.mxu0
    %v293 = vadd.f32 %v208, %v292
    %v294 = vpop.f32.mrf.mxu0
    %v295 = vpop.f32.mrf.mxu0
    %v296 = vpop.f32.mrf.mxu0
    %297 = vdwg.mxu0
    %v298 = vmax.f32 %v293, 0.0
    %v299 = vpack.c.bf16 %v298, %v298
    %v300 = vld [vmem:[#allocation8] sm:$0xf]
    %v301 = vld [vmem:[#allocation8 + $0x4] sm:$0xf]
    %v302 = vld [vmem:[#allocation8 + $0x8] sm:$0xf]
    %v303 = vld [vmem:[#allocation8 + $0xc] sm:$0xf]
    %v304 = vld [vmem:[#allocation8 + $0x10] sm:$0xf]
    %v305 = vld [vmem:[#allocation8 + $0x14] sm:$0xf]
    %v306 = vld [vmem:[#allocation8 + $0x18] sm:$0xf]
    %v307 = vld [vmem:[#allocation8 + $0x1c] sm:$0xf]
    %v308 = vld [vmem:[#allocation8 + $0x20] sm:$0xf]
    %v309 = vld [vmem:[#allocation8 + $0x24] sm:$0xf]
    %v310 = vld [vmem:[#allocation8 + $0x28] sm:$0xf]
    %v311 = vld [vmem:[#allocation8 + $0x2c] sm:$0xf]
    %v312 = vld [vmem:[#allocation8 + $0x30] sm:$0xf]
    %v313 = vld [vmem:[#allocation8 + $0x34] sm:$0xf]
    %v314 = vld [vmem:[#allocation8 + $0x38] sm:$0xf]
    %v315 = vld [vmem:[#allocation8 + $0x3c] sm:$0xf]
    %v316 = vld [vmem:[%s6] sm:$0x1]
    %v318 = vlaneseq
    %v319 = vshrl.u32 %v318, 7
    %v320 = vsub.s32 0, %v319
    %v321 = vrot.slane %v316, %v320
    %v339 = vunpack.c.l.b16 %v300
    %v340 = vunpack.c.l.b16 %v301
    %v341 = vunpack.c.l.b16 %v302
    %v342 = vunpack.c.l.b16 %v303
    %v343 = vunpack.c.l.b16 %v304
    %v344 = vunpack.c.l.b16 %v305
    %v345 = vunpack.c.l.b16 %v306
    %v346 = vunpack.c.l.b16 %v307
    %v347 = vunpack.c.l.b16 %v308
    %v348 = vunpack.c.l.b16 %v309
    %v349 = vunpack.c.l.b16 %v310
    %v350 = vunpack.c.l.b16 %v311
    %v351 = vunpack.c.l.b16 %v312
    %v352 = vunpack.c.l.b16 %v313
    %v353 = vunpack.c.l.b16 %v314
    %v354 = vunpack.c.l.b16 %v315
    %v355 = vpack.c.b16 %v340, %v339
    %v356 = vpack.c.b16 %v342, %v341
    %v357 = vpack.c.b16 %v344, %v343
    %v358 = vpack.c.b16 %v346, %v345
    %v359 = vpack.c.b16 %v348, %v347
    %v360 = vpack.c.b16 %v350, %v349
    %v361 = vpack.c.b16 %v352, %v351
    %v362 = vpack.c.b16 %v354, %v353
    %371 = vmatprep.subr.bf16.mxu0 0
    %372 = vmatpush1.bf16.msra.mxu0 %v362
    %373 = vmatprep.subr.bf16.mxu0 0
    %374 = vmatpush1.bf16.msra.mxu0 %v361
    %375 = vmatprep.subr.bf16.mxu0 0
    %376 = vmatpush1.bf16.msra.mxu0 %v360
    %377 = vmatprep.subr.bf16.mxu0 0
    %378 = vmatpush1.bf16.msra.mxu0 %v359
    %379 = vmatprep.subr.bf16.mxu0 0
    %380 = vmatpush1.bf16.msra.mxu0 %v358
    %381 = vmatprep.subr.bf16.mxu0 0
    %382 = vmatpush1.bf16.msra.mxu0 %v357
    %383 = vmatprep.subr.bf16.mxu0 0
    %384 = vmatpush1.bf16.msra.mxu0 %v356
    %385 = vmatprep.subr.bf16.mxu0 0
    %386 = vmatpush1.bf16.msra.mxu0 %v355
    %387 = vmatprep.subr.bf16.mxu0 0
    %388 = vmatpush2.bf16.msra.mxu0 0
    %389 = vmatprep.subr.bf16.mxu0 0
    %390 = vmatpush2.bf16.msra.mxu0 0
    %391 = vmatprep.subr.bf16.mxu0 0
    %392 = vmatpush2.bf16.msra.mxu0 0
    %393 = vmatprep.subr.bf16.mxu0 0
    %394 = vmatpush2.bf16.msra.mxu0 0
    %395 = vmatprep.subr.bf16.mxu0 0
    %396 = vmatpush2.bf16.msra.mxu0 0
    %397 = vmatprep.subr.bf16.mxu0 0
    %398 = vmatpush2.bf16.msra.mxu0 0
    %399 = vmatprep.subr.bf16.mxu0 0
    %400 = vmatpush2.bf16.msra.mxu0 0
    %401 = vmatprep.subr.bf16.mxu0 0
    %402 = vmatpush2.bf16.msra.mxu0 0
    %403 = vmatprep.mubr.bf16.mxu0 0
    %404 = vmatmul.mubr.bf16.gmra.mxu0 %v299
    %v405 = vpop.f32.mrf.mxu0
    %v406 = vadd.f32 %v321, %v405
    %v407 = vpop.f32.mrf.mxu0
    %v408 = vpop.f32.mrf.mxu0
    %v409 = vpop.f32.mrf.mxu0
    %410 = vdwg.mxu0
    %v411 = vmax.f32 %v406, 0.0
    %v412 = vpack.c.bf16 %v411, %v411
    %v413 = vld [vmem:[#allocation10] sm:$0xf]
    %v414 = vld [vmem:[#allocation10 + $0x4] sm:$0xf]
    %v415 = vld [vmem:[#allocation10 + $0x8] sm:$0xf]
    %v416 = vld [vmem:[#allocation10 + $0xc] sm:$0xf]
    %v417 = vld [vmem:[#allocation10 + $0x10] sm:$0xf]
    %v418 = vld [vmem:[#allocation10 + $0x14] sm:$0xf]
    %v419 = vld [vmem:[#allocation10 + $0x18] sm:$0xf]
    %v420 = vld [vmem:[#allocation10 + $0x1c] sm:$0xf]
    %v421 = vld [vmem:[#allocation10 + $0x20] sm:$0xf]
    %v422 = vld [vmem:[#allocation10 + $0x24] sm:$0xf]
    %v423 = vld [vmem:[#allocation10 + $0x28] sm:$0xf]
    %v424 = vld [vmem:[#allocation10 + $0x2c] sm:$0xf]
    %v425 = vld [vmem:[#allocation10 + $0x30] sm:$0xf]
    %v426 = vld [vmem:[#allocation10 + $0x34] sm:$0xf]
    %v427 = vld [vmem:[#allocation10 + $0x38] sm:$0xf]
    %v428 = vld [vmem:[#allocation10 + $0x3c] sm:$0xf]
    %v429 = vld [vmem:[%s8] sm:$0x1]
    %v431 = vlaneseq
    %v432 = vshrl.u32 %v431, 7
    %v433 = vsub.s32 0, %v432
    %v434 = vrot.slane %v429, %v433
    %v452 = vunpack.c.l.b16 %v413
    %v453 = vunpack.c.l.b16 %v414
    %v454 = vunpack.c.l.b16 %v415
    %v455 = vunpack.c.l.b16 %v416
    %v456 = vunpack.c.l.b16 %v417
    %v457 = vunpack.c.l.b16 %v418
    %v458 = vunpack.c.l.b16 %v419
    %v459 = vunpack.c.l.b16 %v420
    %v460 = vunpack.c.l.b16 %v421
    %v461 = vunpack.c.l.b16 %v422
    %v462 = vunpack.c.l.b16 %v423
    %v463 = vunpack.c.l.b16 %v424
    %v464 = vunpack.c.l.b16 %v425
    %v465 = vunpack.c.l.b16 %v426
    %v466 = vunpack.c.l.b16 %v427
    %v467 = vunpack.c.l.b16 %v428
    %v468 = vpack.c.b16 %v453, %v452
    %v469 = vpack.c.b16 %v455, %v454
    %v470 = vpack.c.b16 %v457, %v456
    %v471 = vpack.c.b16 %v459, %v458
    %v472 = vpack.c.b16 %v461, %v460
    %v473 = vpack.c.b16 %v463, %v462
    %v474 = vpack.c.b16 %v465, %v464
    %v475 = vpack.c.b16 %v467, %v466
    %484 = vmatprep.subr.bf16.mxu0 0
    %485 = vmatpush1.bf16.msra.mxu0 %v475
    %486 = vmatprep.subr.bf16.mxu0 0
    %487 = vmatpush1.bf16.msra.mxu0 %v474
    %488 = vmatprep.subr.bf16.mxu0 0
    %489 = vmatpush1.bf16.msra.mxu0 %v473
    %490 = vmatprep.subr.bf16.mxu0 0
    %491 = vmatpush1.bf16.msra.mxu0 %v472
    %492 = vmatprep.subr.bf16.mxu0 0
    %493 = vmatpush1.bf16.msra.mxu0 %v471
    %494 = vmatprep.subr.bf16.mxu0 0
    %495 = vmatpush1.bf16.msra.mxu0 %v470
    %496 = vmatprep.subr.bf16.mxu0 0
    %497 = vmatpush1.bf16.msra.mxu0 %v469
    %498 = vmatprep.subr.bf16.mxu0 0
    %499 = vmatpush1.bf16.msra.mxu0 %v468
    %500 = vmatprep.subr.bf16.mxu0 0
    %501 = vmatpush2.bf16.msra.mxu0 0
    %502 = vmatprep.subr.bf16.mxu0 0
    %503 = vmatpush2.bf16.msra.mxu0 0
    %504 = vmatprep.subr.bf16.mxu0 0
    %505 = vmatpush2.bf16.msra.mxu0 0
    %506 = vmatprep.subr.bf16.mxu0 0
    %507 = vmatpush2.bf16.msra.mxu0 0
    %508 = vmatprep.subr.bf16.mxu0 0
    %509 = vmatpush2.bf16.msra.mxu0 0
    %510 = vmatprep.subr.bf16.mxu0 0
    %511 = vmatpush2.bf16.msra.mxu0 0
    %512 = vmatprep.subr.bf16.mxu0 0
    %513 = vmatpush2.bf16.msra.mxu0 0
    %514 = vmatprep.subr.bf16.mxu0 0
    %515 = vmatpush2.bf16.msra.mxu0 0
    %516 = vmatprep.mubr.bf16.mxu0 0
    %517 = vmatmul.mubr.bf16.gmra.mxu0 %v412
    %v518 = vpop.f32.mrf.mxu0
    %v519 = vadd.f32 %v434, %v518
    %v520 = vpop.f32.mrf.mxu0
    %v521 = vpop.f32.mrf.mxu0
    %v522 = vpop.f32.mrf.mxu0
    %523 = vdwg.mxu0
    %524 = vst [vmem:[#allocation11] sm:$0xff] %v519
    // Predicated region
    $region58: #{tpu_custom_call.1} parent=1 // pred_check
      _
    $region59: #{tpu_custom_call.1} parent=1 // pred_check_branch
      %526 = sbr.rel (0) target = $region61
    $region60: #{tpu_custom_call.1} parent=1 // pred_region
      %s528 = ssub.s32 128, 128
      %529 = vsyncadd [#allocation4], %s528
      %s531 = sshll.u32 [#allocation11], 4
      %s532 = int_to_ptr.vmem [resolvable:$true] %s531
      %534 = dma.vmem_to_hbm [thread:$0]  %s532, 128, %s9, [#allocation4]
    $region61: #{tpu_custom_call.1} parent=1 // pred_fallthru
      _
    // Predicated region
    $region62: #{tpu_custom_call.1} parent=1 // pred_check
      _
    $region63: #{tpu_custom_call.1} parent=1 // pred_check_branch
      %536 = sbr.rel (0) target = $region65
    $region64: #{tpu_custom_call.1} parent=1 // pred_region
      %537 = dma.done [#allocation4], 128
    $region65: #{tpu_custom_call.1} parent=1 // pred_fallthru
      _
    %538 = vsyncpa [#allocation3], 1
    %539 = vsyncpa [#allocation6], 1
    %540 = vsyncpa [#allocation9], 1
    %541 = vsyncpa [#allocation4], 1

</llo_original>
